<compile_context>
chip_gen: v5e
topology: v5e:2x2
jax: 0.10.0
libtpu: 0.0.40
codegen_flags: <defaults>
</compile_context>

<pallas_src>
import jax
import jax.numpy as jnp
from jax.experimental import pallas as pl
from jax.experimental.pallas import tpu as pltpu


def _preprocess_kernel(x_ref, scale_ref, bias_ref, o_ref):
    """Fused stripe-ablation + per-channel normalization as one affine pass."""
    # x: (tb, tn), scale/bias: (1, tn) -> broadcast over the batch rows.
    x = x_ref[...].astype(jnp.float32)
    o_ref[...] = (x * scale_ref[...] + bias_ref[...]).astype(o_ref.dtype)


_BLOCK_BYTES_CAP = 2 * 1024 * 1024   # per-stream block cap, safe on v5e/v6e/v7x
_LANE_BLOCK_CAP = 8192               # max lanes per block (multiple of 128)


def _pick_block(total, cap, quantum):
    """Largest block <= cap that is either the full extent or a multiple of
    `quantum` that evenly divides `total`."""
    if total <= cap:
        return total
    blk = (cap // quantum) * quantum
    while blk >= quantum and total % blk != 0:
        blk -= quantum
    return blk if blk >= quantum else total


def preprocess(x, pos, mean, std, ablation_size, out_dtype=jnp.float32):
    """Pallas implementation of PreProcessor.forward for the default config."""
    B, C, H, W = x.shape
    assert C in (1, 3), "default PreProcessor path expects 1 or 3 input channels"
    CHW = C * H * W
    # Lane-dense layout needs the flattened row to be a multiple of 128
    # (true for CIFAR 16/32 and upsampled 224/384 image sizes).
    assert CHW % 128 == 0, "C*H*W must be a multiple of 128"  # TODO(synk): pad path

    x2 = x.reshape(B, CHW)           # free row-major view; native dtype

    k = int(ablation_size)
    pos = jnp.asarray(pos, jnp.int32)
    mean = jnp.asarray(mean, jnp.float32).reshape(C)
    istd = 1.0 / jnp.asarray(std, jnp.float32).reshape(C)

    # StripeAblator keep mask with wrap-around expressed as range compares
    # (no modulo): keep columns [pos, pos+k) mod W, zero the rest.
    w_idx = jnp.arange(W, dtype=jnp.int32)
    keep = ((w_idx >= pos) & (w_idx < pos + k)) | (w_idx < pos + k - W)
    keep = keep.astype(jnp.float32)                       # (W,)

    # Fold ablation mask + normalization into one affine map per position:
    #   kept column:   x / std[c] - mean[c]/std[c] = (x - mean[c]) / std[c]
    #   zeroed column:     0      - mean[c]/std[c] = (0 - mean[c]) / std[c]
    scale = jnp.broadcast_to(istd[:, None, None] * keep[None, None, :], (C, H, W))
    bias = jnp.broadcast_to((-mean * istd)[:, None, None], (C, H, W))
    scale = scale.reshape(1, CHW)
    bias = bias.reshape(1, CHW)

    tn = _pick_block(CHW, _LANE_BLOCK_CAP, 128)
    row_cap = max(1, _BLOCK_BYTES_CAP // (4 * tn))        # size by f32 output block
    tb = _pick_block(B, row_cap, 8)
    # Batch axis innermost so the (1, tn) scale/bias blocks keep a constant
    # block index across consecutive steps and are not re-fetched.
    grid = (CHW // tn, B // tb)

    out2 = pl.pallas_call(
        _preprocess_kernel,
        out_shape=jax.ShapeDtypeStruct((B, CHW), out_dtype),
        grid=grid,
        in_specs=[
            pl.BlockSpec((tb, tn), lambda nj, bi: (bi, nj)),   # x
            pl.BlockSpec((1, tn), lambda nj, bi: (0, nj)),     # scale
            pl.BlockSpec((1, tn), lambda nj, bi: (0, nj)),     # bias
        ],
        out_specs=pl.BlockSpec((tb, tn), lambda nj, bi: (bi, nj)),
        compiler_params=pltpu.CompilerParams(
            dimension_semantics=("parallel", "parallel")
        ),
    )(x2, scale, bias)

    return out2.reshape(B, C, H, W)


if __name__ == "__main__":
    key = jax.random.PRNGKey(0)

    # Small CIFAR-like input.
    B, C, H, W = 2, 3, 16, 16
    x = jax.random.uniform(key, (B, C, H, W), dtype=jnp.float32)

    # Deterministic "parameters":
    ablation_size = 4
    ablation_target = 14          # pos + k > W -> exercises the wrap-around branch
    mean = [0.4914, 0.4822, 0.4465]
    std = [0.2470, 0.2435, 0.2616]

    out = preprocess(x, ablation_target, mean, std, ablation_size)
    out = jax.block_until_ready(out)

    # Pure-JAX reference of the same forward pass (independent modulo formulation).
    w_idx = jnp.arange(W)
    keep = ((w_idx + (W - ablation_target)) % W) < ablation_size
    x_abl = x * keep[None, None, None, :].astype(x.dtype)
    ref = (x_abl - jnp.asarray(mean)[None, :, None, None]) / jnp.asarray(std)[
        None, :, None, None
    ]

    assert out.shape == (B, C, H, W)
    assert out.dtype == jnp.float32
    assert jnp.allclose(out, ref, atol=1e-5), "mismatch vs reference"

    print("KERNEL_OK")
</pallas_src>

<mosaic_0001>
module attributes {stable_mosaic.version = 11 : i64} {
  func.func @_preprocess_kernel(%arg0: i32, %arg1: i32, %arg2: memref<2x768xf32, #tpu.memory_space<vmem>>, %arg3: memref<1x768xf32, #tpu.memory_space<vmem>>, %arg4: memref<1x768xf32, #tpu.memory_space<vmem>>, %arg5: memref<2x768xf32, #tpu.memory_space<vmem>>) attributes {dimension_semantics = [#tpu.dimension_semantics<parallel>, #tpu.dimension_semantics<parallel>], iteration_bounds = array<i64: 1, 1>, scalar_prefetch = 0 : i64, scratch_operands = 0 : i64, tpu.core_type = #tpu.core_type<tc>, window_params = [{transform_indices = @transform_0, window_bounds = array<i64: 2, 768>}, {transform_indices = @transform_1, window_bounds = array<i64: 1, 768>}, {transform_indices = @transform_2, window_bounds = array<i64: 1, 768>}, {transform_indices = @transform_3, window_bounds = array<i64: 2, 768>}]} {
    %c0 = arith.constant 0 : index
    %c0_0 = arith.constant 0 : index
    %0 = vector.load %arg2[%c0, %c0_0] : memref<2x768xf32, #tpu.memory_space<vmem>>, vector<2x768xf32>
    %c0_1 = arith.constant 0 : index
    %c0_2 = arith.constant 0 : index
    %1 = vector.load %arg3[%c0_1, %c0_2] : memref<1x768xf32, #tpu.memory_space<vmem>>, vector<1x768xf32>
    %2 = vector.broadcast %1 : vector<1x768xf32> to vector<2x768xf32>
    %3 = arith.mulf %0, %2 : vector<2x768xf32>
    %c0_3 = arith.constant 0 : index
    %c0_4 = arith.constant 0 : index
    %4 = vector.load %arg4[%c0_3, %c0_4] : memref<1x768xf32, #tpu.memory_space<vmem>>, vector<1x768xf32>
    %5 = vector.broadcast %4 : vector<1x768xf32> to vector<2x768xf32>
    %6 = arith.addf %3, %5 : vector<2x768xf32>
    %c0_5 = arith.constant 0 : index
    %c0_6 = arith.constant 0 : index
    %7 = vector.load %arg5[%c0_5, %c0_6] : memref<2x768xf32, #tpu.memory_space<vmem>>, vector<2x768xf32>
    tpu.vector_store %arg5[%c0_5, %c0_6], %6 {strides = array<i32>} : memref<2x768xf32, #tpu.memory_space<vmem>>, vector<2x768xf32>,
    return
  }
  func.func @transform_0(%arg0: i32, %arg1: i32) -> (i32, i32) {
    %c0_i32 = arith.constant 0 : i32
    return %arg1, %arg0 : i32, i32
  }
  func.func @transform_1(%arg0: i32, %arg1: i32) -> (i32, i32) {
    %c0_i32 = arith.constant 0 : i32
    %c0_i32_0 = arith.constant 0 : i32
    return %c0_i32, %arg0 : i32, i32
  }
  func.func @transform_2(%arg0: i32, %arg1: i32) -> (i32, i32) {
    %c0_i32 = arith.constant 0 : i32
    %c0_i32_0 = arith.constant 0 : i32
    return %c0_i32, %arg0 : i32, i32
  }
  func.func @transform_3(%arg0: i32, %arg1: i32) -> (i32, i32) {
    %c0_i32 = arith.constant 0 : i32
    return %arg1, %arg0 : i32, i32
  }
}

</mosaic_0001>

<llo_original>
// kernel: tpu_custom_call.1
$region0: #{tpu_custom_call.1}
  #allocation0 [shape = 'u32[]', space=smem, size = 0x4, offset = 0x4, fixed_abs, tag = 'smem constant byte address 0x4 - core index']
  #allocation1 [shape = 'u32[72,128]{1,0:T(1,128)}', space=vmem, size = 0x9000, scoped, tag = 'internal scratch']
  %s0 = inlined_call_operand.hbm [shape: f32[2,768], index: 0, kind: input, shape index: {}]
  %s1 = inlined_call_operand.hbm [shape: f32[1,768], index: 1, kind: input, shape index: {}]
  %s2 = inlined_call_operand.hbm [shape: f32[1,768], index: 2, kind: input, shape index: {}]
  %s3 = inlined_call_operand.hbm [shape: f32[2,768], index: 3, kind: output, shape index: {}]
  %s4 = sld [smem:[#allocation0]]
  $region34: #{tpu_custom_call.1} parent=0
    _
  %s6 = ssub.s32 1, %s4
  %s7 = scalar_select 0, %s6, %s4
  $region1: #{tpu_custom_call.1} parent=0
    #allocation2 [shape = 'u8[6144]{0}', space=vmem, size = 0x1800, scoped, tag = 'input window, operand 0, single buffered']
    #allocation3 [shape = 's32[1]{0}', space=sflag, size = 0x4, scoped, tag = 'scoped memory for tpu_custom_call.1']
    #allocation4 [shape = 's32[1]{0}', space=sflag, size = 0x4, scoped, tag = 'scoped memory for tpu_custom_call.1']
    #allocation5 [shape = 'u8[3072]{0}', space=vmem, size = 0xc00, scoped, tag = 'input window, operand 1, single buffered']
    #allocation6 [shape = 's32[1]{0}', space=sflag, size = 0x4, scoped, tag = 'scoped memory for tpu_custom_call.1']
    #allocation7 [shape = 'u8[3072]{0}', space=vmem, size = 0xc00, scoped, tag = 'input window, operand 2, single buffered']
    #allocation8 [shape = 'u8[6144]{0}', space=vmem, size = 0x1800, scoped, tag = 'output window, operand 0, single buffered']
    %8 = vsyncpa [#allocation3], 0
    %9 = vsyncpa [#allocation6], 0
    %10 = vsyncpa [#allocation4], 0
    // Predicated region
    $region2: #{tpu_custom_call.1} parent=1 // pred_check
      _
    $region3: #{tpu_custom_call.1} parent=1 // pred_check_branch
      %12 = sbr.rel (0) target = $region5
    $region4: #{tpu_custom_call.1} parent=1 // pred_region
      %14 = vsyncadd [#allocation3], 0
      %s16 = sshll.u32 %s0, 4
      %s17 = int_to_ptr.hbm [resolvable:$true] %s16
      %s18 = sshll.u32 [#allocation2], 4
      %s19 = int_to_ptr.vmem [resolvable:$true] %s18
      %21 = dma.hbm_to_vmem [thread:$0]  %s17, 192, %s19, [#allocation3]
    $region5: #{tpu_custom_call.1} parent=1 // pred_fallthru
      _
    // Predicated region
    $region6: #{tpu_custom_call.1} parent=1 // pred_check
      _
    $region7: #{tpu_custom_call.1} parent=1 // pred_check_branch
      %23 = sbr.rel (0) target = $region9
    $region8: #{tpu_custom_call.1} parent=1 // pred_region
      %25 = vsyncadd [#allocation6], 0
      %s27 = sshll.u32 %s1, 4
      %s28 = int_to_ptr.hbm [resolvable:$true] %s27
      %s29 = sshll.u32 [#allocation5], 4
      %s30 = int_to_ptr.vmem [resolvable:$true] %s29
      %32 = dma.hbm_to_vmem [thread:$0]  %s28, 96, %s30, [#allocation6]
    $region9: #{tpu_custom_call.1} parent=1 // pred_fallthru
      _
    // Predicated region
    $region10: #{tpu_custom_call.1} parent=1 // pred_check
      _
    $region11: #{tpu_custom_call.1} parent=1 // pred_check_branch
      %34 = sbr.rel (0) target = $region13
    $region12: #{tpu_custom_call.1} parent=1 // pred_region
      %36 = vsyncadd [#allocation6], 0
      %s38 = sshll.u32 %s2, 4
      %s39 = int_to_ptr.hbm [resolvable:$true] %s38
      %s40 = sshll.u32 [#allocation7], 4
      %s41 = int_to_ptr.vmem [resolvable:$true] %s40
      %43 = dma.hbm_to_vmem [thread:$0]  %s39, 96, %s41, [#allocation6]
    $region13: #{tpu_custom_call.1} parent=1 // pred_fallthru
      _
    // Predicated region
    $region14: #{tpu_custom_call.1} parent=1 // pred_check
      _
    $region15: #{tpu_custom_call.1} parent=1 // pred_check_branch
      %45 = sbr.rel (0) target = $region17
    $region16: #{tpu_custom_call.1} parent=1 // pred_region
      %47 = dma.done [#allocation3], 192
    $region17: #{tpu_custom_call.1} parent=1 // pred_fallthru
      _
    // Predicated region
    $region18: #{tpu_custom_call.1} parent=1 // pred_check
      _
    $region19: #{tpu_custom_call.1} parent=1 // pred_check_branch
      %49 = sbr.rel (0) target = $region21
    $region20: #{tpu_custom_call.1} parent=1 // pred_region
      %51 = dma.done [#allocation6], 96
    $region21: #{tpu_custom_call.1} parent=1 // pred_fallthru
      _
    // Predicated region
    $region22: #{tpu_custom_call.1} parent=1 // pred_check
      _
    $region23: #{tpu_custom_call.1} parent=1 // pred_check_branch
      %53 = sbr.rel (0) target = $region25
    $region24: #{tpu_custom_call.1} parent=1 // pred_region
      %55 = dma.done [#allocation6], 96
    $region25: #{tpu_custom_call.1} parent=1 // pred_fallthru
      _
    %v56 = vld [vmem:[#allocation2] sm:$0xff]
    %v57 = vld [vmem:[#allocation2 + $0x8] sm:$0xf]
    %v58 = vld [vmem:[#allocation5] sm:$0x3f]
    %v60 = vperm.slane %v58, 0
    %v61 = vperm.slane %v58, 1
    %v62 = vperm.slane %v58, 2
    %v63 = vperm.slane %v58, 3
    %v64 = vperm.slane %v58, 4
    %v65 = vperm.slane %v58, 5
    %v66 = vrot.slane %v61, 6
    %v67 = vrot.slane %v62, 4
    %v68 = vrot.slane %v63, 2
    %v69 = vrot.slane %v65, 6
    %vm70 = vcmask 1041408
    %v71 = vsel %vm70, %v60, %v66
    %vm72 = vcmask 1045508
    %v73 = vsel %vm72, %v67, %v68
    %vm74 = vcmask 1043456
    %v75 = vsel %vm74, %v71, %v73
    %v76 = vsel %vm70, %v64, %v69
    %v79 = vmul.f32 %v56, %v75
    %v80 = vmul.f32 %v57, %v76
    %v81 = vld [vmem:[#allocation7] sm:$0x3f]
    %v83 = vperm.slane %v81, 0
    %v84 = vperm.slane %v81, 1
    %v85 = vperm.slane %v81, 2
    %v86 = vperm.slane %v81, 3
    %v87 = vperm.slane %v81, 4
    %v88 = vperm.slane %v81, 5
    %v89 = vrot.slane %v84, 6
    %v90 = vrot.slane %v85, 4
    %v91 = vrot.slane %v86, 2
    %v92 = vrot.slane %v88, 6
    %v93 = vsel %vm70, %v83, %v89
    %v94 = vsel %vm72, %v90, %v91
    %v95 = vsel %vm74, %v93, %v94
    %v96 = vsel %vm70, %v87, %v92
    %v99 = vadd.f32 %v79, %v95
    %v100 = vadd.f32 %v80, %v96
    %101 = vst [vmem:[#allocation8] sm:$0xff] %v99
    %102 = vst [vmem:[#allocation8 + $0x8] sm:$0xf] %v100
    // Predicated region
    $region26: #{tpu_custom_call.1} parent=1 // pred_check
      _
    $region27: #{tpu_custom_call.1} parent=1 // pred_check_branch
      %104 = sbr.rel (0) target = $region29
    $region28: #{tpu_custom_call.1} parent=1 // pred_region
      %106 = vsyncadd [#allocation4], 0
      %s108 = sshll.u32 [#allocation8], 4
      %s109 = int_to_ptr.vmem [resolvable:$true] %s108
      %s110 = sshll.u32 %s3, 4
      %s111 = int_to_ptr.hbm [resolvable:$true] %s110
      %113 = dma.vmem_to_hbm [thread:$0]  %s109, 192, %s111, [#allocation4]
    $region29: #{tpu_custom_call.1} parent=1 // pred_fallthru
      _
    // Predicated region
    $region30: #{tpu_custom_call.1} parent=1 // pred_check
      _
    $region31: #{tpu_custom_call.1} parent=1 // pred_check_branch
      %115 = sbr.rel (0) target = $region33
    $region32: #{tpu_custom_call.1} parent=1 // pred_region
      %117 = dma.done [#allocation4], 192
    $region33: #{tpu_custom_call.1} parent=1 // pred_fallthru
      _
    %118 = vsyncpa [#allocation3], 1
    %119 = vsyncpa [#allocation6], 1
    %120 = vsyncpa [#allocation4], 1

</llo_original>
